<compile_context>
chip_gen: v5e
topology: v5e:2x2
jax: 0.10.0
libtpu: 0.0.40
codegen_flags: <defaults>
</compile_context>

<pallas_src>
import jax
import jax.numpy as jnp
from jax.experimental import pallas as pl
from jax.experimental.pallas import tpu as pltpu


def _round_up(a, b):
    return (a + b - 1) // b * b


_MAX_FULL_TILE = 4096            # one spatial tile per image up to this many patches
_FALLBACK_TS = 2048              # fixed spatial tile for very large images
_VMEM_LIMIT = 48 * 1024 * 1024   # headroom inside v7x's 64 MiB physical VMEM


# ----------------------------------------------------------------------------
# Pass 1: per-image, per-channel sum / sum-of-squares of y = W @ patches
# ----------------------------------------------------------------------------
def _stats_kernel(p_ref, w_ref, sum_ref, sq_ref):
    # p_ref:   (1, K, TS)     patch tile (lane dim = spatial tile)
    # w_ref:   (E_pad, K)     conv weight, constant block
    # sum_ref: (1, E_pad, 1)  f32 per-image partial accumulator (resident over si)
    # sq_ref:  (1, E_pad, 1)  f32 per-image partial accumulator
    @pl.when(pl.program_id(1) == 0)
    def _init():
        sum_ref[...] = jnp.zeros_like(sum_ref)
        sq_ref[...] = jnp.zeros_like(sq_ref)

    y = jnp.dot(w_ref[...], p_ref[0], preferred_element_type=jnp.float32)  # (E_pad, TS)
    # lane reductions use the XLU slot and overlap with the MXU push
    sum_ref[0] += jnp.sum(y, axis=1, keepdims=True)
    sq_ref[0] += jnp.sum(y * y, axis=1, keepdims=True)


def _bn_stats(patches, w_ek, *, ts):
    n, k, s_pad = patches.shape
    e_pad = w_ek.shape[0]
    n_sp = s_pad // ts
    flops = int(2 * e_pad * k * n * s_pad + 3 * e_pad * n * s_pad)
    bytes_acc = int(patches.size * patches.dtype.itemsize
                    + w_ek.size * w_ek.dtype.itemsize
                    + 2 * n * e_pad * 4)
    return pl.pallas_call(
        _stats_kernel,
        out_shape=(jax.ShapeDtypeStruct((n, e_pad, 1), jnp.float32),
                   jax.ShapeDtypeStruct((n, e_pad, 1), jnp.float32)),
        grid_spec=pltpu.PrefetchScalarGridSpec(
            num_scalar_prefetch=0,
            grid=(n, n_sp),
            in_specs=[
                pl.BlockSpec((1, k, ts), lambda ni, si: (ni, 0, si)),
                pl.BlockSpec((e_pad, k), lambda ni, si: (0, 0)),
            ],
            out_specs=[
                pl.BlockSpec((1, e_pad, 1), lambda ni, si: (ni, 0, 0)),
                pl.BlockSpec((1, e_pad, 1), lambda ni, si: (ni, 0, 0)),
            ],
        ),
        compiler_params=pltpu.CompilerParams(
            dimension_semantics=("parallel", "arbitrary"),
            vmem_limit_bytes=_VMEM_LIMIT),
        cost_estimate=pl.CostEstimate(flops=flops, transcendentals=0,
                                      bytes_accessed=bytes_acc),
    )(patches, w_ek)


# ----------------------------------------------------------------------------
# Pass 2: recompute matmul per tile and apply folded per-channel scale/shift
# ----------------------------------------------------------------------------
def _apply_kernel(p_ref, w_ref, scale_ref, shift_ref, o_ref):
    # p_ref:     (1, K, TS)
    # w_ref:     (E_pad, K)
    # scale_ref: (E_pad, 1)     gamma * rsqrt(var + eps)
    # shift_ref: (E_pad, 1)     beta - mean * scale
    # o_ref:     (1, E_pad, TS) already NCHW-ordered, lane dim = spatial
    y = jnp.dot(w_ref[...], p_ref[0], preferred_element_type=jnp.float32)  # (E_pad, TS)
    o_ref[0] = (y * scale_ref[...] + shift_ref[...]).astype(o_ref.dtype)


def _bn_apply(patches, w_ek, scale, shift, *, ts, out_dtype):
    n, k, s_pad = patches.shape
    e_pad = w_ek.shape[0]
    n_sp = s_pad // ts
    flops = int(2 * e_pad * k * n * s_pad + 2 * e_pad * n * s_pad)
    bytes_acc = int(patches.size * patches.dtype.itemsize
                    + w_ek.size * w_ek.dtype.itemsize
                    + 2 * e_pad * 4
                    + n * e_pad * s_pad * jnp.dtype(out_dtype).itemsize)
    return pl.pallas_call(
        _apply_kernel,
        out_shape=jax.ShapeDtypeStruct((n, e_pad, s_pad), out_dtype),
        grid_spec=pltpu.PrefetchScalarGridSpec(
            num_scalar_prefetch=0,
            grid=(n, n_sp),
            in_specs=[
                pl.BlockSpec((1, k, ts), lambda ni, si: (ni, 0, si)),
                pl.BlockSpec((e_pad, k), lambda ni, si: (0, 0)),
                pl.BlockSpec((e_pad, 1), lambda ni, si: (0, 0)),
                pl.BlockSpec((e_pad, 1), lambda ni, si: (0, 0)),
            ],
            out_specs=pl.BlockSpec((1, e_pad, ts), lambda ni, si: (ni, 0, si)),
        ),
        compiler_params=pltpu.CompilerParams(
            dimension_semantics=("parallel", "parallel"),
            vmem_limit_bytes=_VMEM_LIMIT),
        cost_estimate=pl.CostEstimate(flops=flops, transcendentals=0,
                                      bytes_accessed=bytes_acc),
    )(patches, w_ek, scale, shift)


# ----------------------------------------------------------------------------
# Python-side module: parameter setup + layout glue around the kernels
# ----------------------------------------------------------------------------
class PatchEmbedPallas:
    def __init__(self, patch_size=4, in_chans=3, embed_dim=96, *, key,
                 compute_dtype=jnp.bfloat16, out_dtype=jnp.float32):
        # compute_dtype=bf16 halves streamed HBM bytes (f32 accumulation retained).
        # out_dtype stays f32 by default for parity with the PyTorch module; pass
        # bf16 if the consumer accepts it (halves the store traffic, esp. on v5e).
        self.patch_size = (patch_size, patch_size)
        self.in_chans = in_chans
        self.embed_dim = embed_dim
        self.eps = 1e-5
        self.compute_dtype = jnp.dtype(compute_dtype)
        self.out_dtype = jnp.dtype(out_dtype)

        ph, pw = self.patch_size
        k_w, k_b, k_g, k_be = jax.random.split(key, 4)
        fan_in = in_chans * ph * pw
        bound = 1.0 / (fan_in ** 0.5)
        # Conv2d(in_chans, embed_dim, kernel_size=patch, stride=patch)
        self.conv_w = jax.random.uniform(
            k_w, (embed_dim, in_chans, ph, pw), jnp.float32, -bound, bound)
        # conv bias kept for interface parity; NOT used in the kernels (cancels
        # exactly under training-mode BatchNorm -- only valid for batch statistics,
        # would be a real error if eval mode / running stats are ever added).
        self.conv_b = jax.random.uniform(
            k_b, (embed_dim,), jnp.float32, -bound, bound)
        # BatchNorm2d affine params (random so the affine path is exercised)
        self.bn_gamma = 1.0 + 0.1 * jax.random.normal(k_g, (embed_dim,), jnp.float32)
        self.bn_beta = 0.1 * jax.random.normal(k_be, (embed_dim,), jnp.float32)

    def __call__(self, x):
        # x: (N, C, H, W) NCHW, like the PyTorch module.
        N, C, H, W = x.shape
        ph, pw = self.patch_size
        # Right/bottom zero padding to multiples of the patch size (F.pad semantics).
        pad_w = (pw - W % pw) % pw
        pad_h = (ph - H % ph) % ph
        x = x.astype(self.compute_dtype)          # cast BEFORE the shuffle (half bytes)
        if pad_w or pad_h:
            x = jnp.pad(x, ((0, 0), (0, 0), (0, pad_h), (0, pad_w)))
        H2, W2 = H + pad_h, W + pad_w
        Hp, Wp = H2 // ph, W2 // pw
        S = Hp * Wp
        K = C * ph * pw
        E = self.embed_dim
        # sublane packing of the compute dtype (bf16 packs 16 rows/vreg)
        sub = 8 * (4 // self.compute_dtype.itemsize)
        E_pad = _round_up(E, sub)

        # K-major patch extraction: (N, K, S), K ordered (C, ph, pw) to match the
        # Conv2d weight flattening and S ordered (Hp, Wp) -> kernel output is already
        # NCHW (no output-side HBM transpose).  Done in compute_dtype (bf16 default).
        p = x.reshape(N, C, Hp, ph, Wp, pw)
        p = p.transpose(0, 1, 3, 5, 2, 4)          # (N, C, ph, pw, Hp, Wp)
        p = p.reshape(N, K, S)

        if S <= _MAX_FULL_TILE:
            # One spatial tile per image: block dim == full dim (always legal),
            # no S padding and no post-kernel slice copy.
            TS, S_pad = S, S
        else:
            TS = _FALLBACK_TS
            S_pad = _round_up(S, TS)
            p = jnp.pad(p, ((0, 0), (0, 0), (0, S_pad - S)))

        w_ek = self.conv_w.reshape(E, K)
        if E_pad != E:
            w_ek = jnp.pad(w_ek, ((0, E_pad - E), (0, 0)))
        w_ek = w_ek.astype(self.compute_dtype)

        # Pass 1: per-image partial sums, reduced over N on the host (N*E floats).
        s1, s2 = _bn_stats(p, w_ek, ts=TS)
        m_total = float(N * S)                     # padded columns contribute zero
        mean = jnp.sum(s1[:, :, 0], axis=0) / m_total
        # NOTE: sumsq/M - mean^2 in f32 can cancel when |mean| >> std; clamp at 0.
        var = jnp.maximum(jnp.sum(s2[:, :, 0], axis=0) / m_total - mean * mean, 0.0)

        gamma = self.bn_gamma
        beta = self.bn_beta
        if E_pad != E:
            gamma = jnp.pad(gamma, (0, E_pad - E))
            beta = jnp.pad(beta, (0, E_pad - E))
        inv_std = jax.lax.rsqrt(var + self.eps)
        scale = (gamma * inv_std).astype(jnp.float32).reshape(E_pad, 1)
        shift = (beta - mean * gamma * inv_std).astype(jnp.float32).reshape(E_pad, 1)

        # Pass 2: recompute the matmul per tile and apply folded scale/shift.
        out = _bn_apply(p, w_ek, scale, shift, ts=TS, out_dtype=self.out_dtype)

        if E_pad != E or S_pad != S:
            out = out[:, :E, :S]                   # only on the large-image fallback
        return out.reshape(N, E, Hp, Wp)


# ----------------------------------------------------------------------------
# Reference (pure JAX, f32) for a sanity check
# ----------------------------------------------------------------------------
def _reference(module, x):
    ph, pw = module.patch_size
    _, _, H, W = x.shape
    pad_w = (pw - W % pw) % pw
    pad_h = (ph - H % ph) % ph
    x = jnp.pad(x, ((0, 0), (0, 0), (0, pad_h), (0, pad_w)))
    y = jax.lax.conv_general_dilated(
        x, module.conv_w, window_strides=(ph, pw), padding="VALID",
        dimension_numbers=("NCHW", "OIHW", "NCHW"))
    y = y + module.conv_b[None, :, None, None]
    mean = jnp.mean(y, axis=(0, 2, 3), keepdims=True)
    var = jnp.mean((y - mean) ** 2, axis=(0, 2, 3), keepdims=True)
    y = (y - mean) * jax.lax.rsqrt(var + module.eps)
    return y * module.bn_gamma[None, :, None, None] + module.bn_beta[None, :, None, None]


if __name__ == "__main__":
    key = jax.random.PRNGKey(0)
    k_param, k_x = jax.random.split(key)

    # Small shapes consistent with the module: patch_size=4, in_chans=4, embed_dim=32
    x = jax.random.normal(k_x, (2, 4, 16, 16), jnp.float32)   # NCHW

    # Default (bf16 compute) module and an f32-compute module for a tight check.
    module_bf16 = PatchEmbedPallas(patch_size=4, in_chans=4, embed_dim=32, key=k_param)
    module_f32 = PatchEmbedPallas(patch_size=4, in_chans=4, embed_dim=32, key=k_param,
                                  compute_dtype=jnp.float32)

    out_bf16 = jax.block_until_ready(module_bf16(x))
    out_f32 = jax.block_until_ready(module_f32(x))

    ref = _reference(module_f32, x)
    assert out_bf16.shape == (2, 32, 4, 4), out_bf16.shape
    assert out_f32.shape == (2, 32, 4, 4), out_f32.shape
    assert jnp.allclose(out_f32, ref, atol=1e-3, rtol=1e-3), \
        float(jnp.max(jnp.abs(out_f32 - ref)))
    # bf16 inputs (f32 accumulation) against the f32 reference: looser tolerance.
    assert jnp.allclose(out_bf16, ref, atol=7e-2, rtol=7e-2), \
        float(jnp.max(jnp.abs(out_bf16 - ref)))

    print("KERNEL_OK")
</pallas_src>

<mosaic_0001>
module attributes {stable_mosaic.version = 11 : i64} {
  func.func @_stats_kernel(%arg0: i32, %arg1: i32, %arg2: memref<1x64x16xbf16, #tpu.memory_space<vmem>>, %arg3: memref<32x64xbf16, #tpu.memory_space<vmem>>, %arg4: memref<1x32x1xf32, #tpu.memory_space<vmem>>, %arg5: memref<1x32x1xf32, #tpu.memory_space<vmem>>) attributes {dimension_semantics = [#tpu.dimension_semantics<parallel>, #tpu.dimension_semantics<arbitrary>], iteration_bounds = array<i64: 2, 1>, scalar_prefetch = 0 : i64, scratch_operands = 0 : i64, tpu.core_type = #tpu.core_type<tc>, window_params = [{transform_indices = @transform_0, window_bounds = array<i64: 1, 64, 16>}, {pipeline_mode = #tpu.pipeline_mode<synchronous>, transform_indices = @transform_1, window_bounds = array<i64: 32, 64>}, {transform_indices = @transform_2, window_bounds = array<i64: 1, 32, 1>}, {transform_indices = @transform_3, window_bounds = array<i64: 1, 32, 1>}]} {
    %c0_i32 = arith.constant 0 : i32
    %0 = arith.cmpi eq, %arg1, %c0_i32 : i32
    %1 = arith.extui %0 : i1 to i32
    %c0_i32_0 = arith.constant 0 : i32
    %2 = arith.cmpi ne, %1, %c0_i32_0 : i32
    scf.if %2 {
      %cst_19 = arith.constant 0.000000e+00 : f32
      %24 = vector.broadcast %cst_19 : f32 to vector<1x32x1xf32>
      %c0_20 = arith.constant 0 : index
      %c0_21 = arith.constant 0 : index
      %c0_22 = arith.constant 0 : index
      %25 = vector.load %arg4[%c0_20, %c0_21, %c0_22] : memref<1x32x1xf32, #tpu.memory_space<vmem>>, vector<1x32x1xf32>
      tpu.vector_store %arg4[%c0_20, %c0_21, %c0_22], %24 {strides = array<i32>} : memref<1x32x1xf32, #tpu.memory_space<vmem>>, vector<1x32x1xf32>,
      %cst_23 = arith.constant 0.000000e+00 : f32
      %26 = vector.broadcast %cst_23 : f32 to vector<1x32x1xf32>
      %c0_24 = arith.constant 0 : index
      %c0_25 = arith.constant 0 : index
      %c0_26 = arith.constant 0 : index
      %27 = vector.load %arg5[%c0_24, %c0_25, %c0_26] : memref<1x32x1xf32, #tpu.memory_space<vmem>>, vector<1x32x1xf32>
      tpu.vector_store %arg5[%c0_24, %c0_25, %c0_26], %26 {strides = array<i32>} : memref<1x32x1xf32, #tpu.memory_space<vmem>>, vector<1x32x1xf32>,
    } else {
    }
    %c0 = arith.constant 0 : index
    %c0_1 = arith.constant 0 : index
    %3 = vector.load %arg3[%c0, %c0_1] : memref<32x64xbf16, #tpu.memory_space<vmem>>, vector<32x64xbf16>
    %c0_2 = arith.constant 0 : index
    %c0_3 = arith.constant 0 : index
    %c0_4 = arith.constant 0 : index
    %4 = vector.load %arg2[%c0_2, %c0_3, %c0_4] : memref<1x64x16xbf16, #tpu.memory_space<vmem>>, vector<1x64x16xbf16>
    %5 = vector.shape_cast %4 : vector<1x64x16xbf16> to vector<64x16xbf16>
    %cst = arith.constant dense<0.000000e+00> : vector<32x16xf32>
    %6 = tpu.matmul %3, %5, %cst {dimension_numbers = #tpu.dot_dimension_numbers<[1], [0], [0], [1], [0, 0, 1, 1], [], []>} : vector<32x64xbf16>, vector<64x16xbf16>, vector<32x16xf32> -> vector<32x16xf32>
    %c0_5 = arith.constant 0 : index
    %c0_6 = arith.constant 0 : index
    %c0_7 = arith.constant 0 : index
    %7 = vector.load %arg4[%c0_5, %c0_6, %c0_7] : memref<1x32x1xf32, #tpu.memory_space<vmem>>, vector<1x32x1xf32>
    %8 = vector.shape_cast %7 : vector<1x32x1xf32> to vector<32x1xf32>
    %cst_8 = arith.constant dense<0.000000e+00> : vector<32xf32>
    %9 = vector.multi_reduction <add>, %6, %cst_8 [1] : vector<32x16xf32> to vector<32xf32>
    %10 = vector.shape_cast %9 : vector<32xf32> to vector<32x1xf32>
    %11 = arith.addf %8, %10 : vector<32x1xf32>
    %c0_9 = arith.constant 0 : index
    %c0_10 = arith.constant 0 : index
    %c0_11 = arith.constant 0 : index
    %12 = vector.load %arg4[%c0_9, %c0_10, %c0_11] : memref<1x32x1xf32, #tpu.memory_space<vmem>>, vector<1x32x1xf32>
    %13 = vector.shape_cast %12 : vector<1x32x1xf32> to vector<32x1xf32>
    %14 = vector.shape_cast %11 : vector<32x1xf32> to vector<1x32x1xf32>
    tpu.vector_store %arg4[%c0_9, %c0_10, %c0_11], %14 {strides = array<i32>} : memref<1x32x1xf32, #tpu.memory_space<vmem>>, vector<1x32x1xf32>,
    %c0_12 = arith.constant 0 : index
    %c0_13 = arith.constant 0 : index
    %c0_14 = arith.constant 0 : index
    %15 = vector.load %arg5[%c0_12, %c0_13, %c0_14] : memref<1x32x1xf32, #tpu.memory_space<vmem>>, vector<1x32x1xf32>
    %16 = vector.shape_cast %15 : vector<1x32x1xf32> to vector<32x1xf32>
    %17 = arith.mulf %6, %6 : vector<32x16xf32>
    %cst_15 = arith.constant dense<0.000000e+00> : vector<32xf32>
    %18 = vector.multi_reduction <add>, %17, %cst_15 [1] : vector<32x16xf32> to vector<32xf32>
    %19 = vector.shape_cast %18 : vector<32xf32> to vector<32x1xf32>
    %20 = arith.addf %16, %19 : vector<32x1xf32>
    %c0_16 = arith.constant 0 : index
    %c0_17 = arith.constant 0 : index
    %c0_18 = arith.constant 0 : index
    %21 = vector.load %arg5[%c0_16, %c0_17, %c0_18] : memref<1x32x1xf32, #tpu.memory_space<vmem>>, vector<1x32x1xf32>
    %22 = vector.shape_cast %21 : vector<1x32x1xf32> to vector<32x1xf32>
    %23 = vector.shape_cast %20 : vector<32x1xf32> to vector<1x32x1xf32>
    tpu.vector_store %arg5[%c0_16, %c0_17, %c0_18], %23 {strides = array<i32>} : memref<1x32x1xf32, #tpu.memory_space<vmem>>, vector<1x32x1xf32>,
    return
  }
  func.func @transform_0(%arg0: i32, %arg1: i32) -> (i32, i32, i32) {
    %c0_i32 = arith.constant 0 : i32
    %c0_i32_0 = arith.constant 0 : i32
    return %arg0, %c0_i32, %arg1 : i32, i32, i32
  }
  func.func @transform_1(%arg0: i32, %arg1: i32) -> (i32, i32) {
    %c0_i32 = arith.constant 0 : i32
    %c0_i32_0 = arith.constant 0 : i32
    %c0_i32_1 = arith.constant 0 : i32
    return %c0_i32, %c0_i32_0 : i32, i32
  }
  func.func @transform_2(%arg0: i32, %arg1: i32) -> (i32, i32, i32) {
    %c0_i32 = arith.constant 0 : i32
    %c0_i32_0 = arith.constant 0 : i32
    %c0_i32_1 = arith.constant 0 : i32
    return %arg0, %c0_i32, %c0_i32_0 : i32, i32, i32
  }
  func.func @transform_3(%arg0: i32, %arg1: i32) -> (i32, i32, i32) {
    %c0_i32 = arith.constant 0 : i32
    %c0_i32_0 = arith.constant 0 : i32
    %c0_i32_1 = arith.constant 0 : i32
    return %arg0, %c0_i32, %c0_i32_0 : i32, i32, i32
  }
}

</mosaic_0001>

<llo_original>
// kernel: tpu_custom_call.1
$region0: #{tpu_custom_call.1}
  #allocation0 [shape = 'u32[]', space=smem, size = 0x4, offset = 0x4, fixed_abs, tag = 'smem constant byte address 0x4 - core index']
  #allocation1 [shape = 'u32[72,128]{1,0:T(1,128)}', space=vmem, size = 0x9000, scoped, tag = 'internal scratch']
  %s0 = inlined_call_operand.vmem [shape: bf16[2,64,16], index: 0, kind: input, shape index: {}]
  %s1 = inlined_call_operand.vmem [shape: bf16[32,64], index: 1, kind: input, shape index: {}]
  %s2 = inlined_call_operand.vmem [shape: f32[2,32,1], index: 2, kind: output, shape index: {0}]
  %s3 = inlined_call_operand.vmem [shape: f32[2,32,1], index: 3, kind: output, shape index: {1}]
  %4 = xla_tuple %s2, %s3
  %s5 = sld [smem:[#allocation0]]
  $region53: #{tpu_custom_call.1} parent=0
    _
  %s7 = ssub.s32 1, %s5
  %s8 = scalar_select 0, %s7, %s5
  loop: start=0, step=1, limit=4
  $region2: #{tpu_custom_call.1} parent=0 // loop_pre_header
    _
  $region3: #{tpu_custom_call.1} parent=0 // loop_header
    %s10 = sphi 0, %s14
    %p11 = scmp.ge.s32.totalorder %s10, 4
    %s17 = sphi 0, %s29
    %s18 = sphi 0, %s25
    %s19 = sphi 0, %s17
    %s20 = sphi 0, %s18
    %s21 = sphi 0, %s19
    %s22 = sphi 0, %s20
    %s34 = sphi 0, %s36
    %s37 = sphi 0, %s34
    %s38 = sphi 0, %s37
    %s54 = sphi 0, %s38
    %s58 = sphi 0, %s58
    %s60 = sphi 0, %s58
    %s61 = sphi 0, %s60
    %s75 = sphi 0, %s61
    %s81 = sphi 0, %s83
    %s84 = sphi 0, %s81
    %s85 = sphi 0, %s84
    %s101 = sphi 0, %s85
    %s107 = sphi 0, %s109
    %s110 = sphi 0, %s107
    %s111 = sphi 0, %s110
    %s127 = sphi 0, %s111
  $region4: #{tpu_custom_call.1} parent=0 // loop_header_branch
    %13 = sbr.rel (%p11) target = $region8
  $region5: #{tpu_custom_call.1} parent=0 // loop_body
    %s15 = ssub.s32 %s10, 1
    %s16 = ssub.s32 %s10, 2
    %s23 = sadd.s32 1, %s18
    %p24 = scmp.ge.s32.totalorder %s23, 1
    %s25 = scalar_select %p24, 0, %s23
    %s26 = sadd.s32 1, %s17
    %s27 = scalar_select %p24, %s26, %s17
    %p28 = scmp.ge.s32.totalorder %s27, 2
    %s29 = scalar_select %p28, 0, %s27
    %s30 = ssub.s32 %s17, %s29
    %s31 = ssub.s32 %s18, %s25
    %s32 = sor.u32 %s30, %s31
    %p33 = scmp.eq.s32.totalorder %s32, 0
    %s35 = sadd.s32 %s34, 1
    %s36 = scalar_select %p33, %s34, %s35
    %p39 = pneg %p33
    %p40 = scmp.eq.s32.totalorder %s10, 1
    %p41 = por %p39, %p40
    %p42 = scmp.ne.s32.totalorder %s34, %s37
    %p43 = scmp.eq.s32.totalorder %s10, 0
    %p44 = por %p42, %p43
    %p45 = scmp.ne.s32.totalorder %s34, %s37
    %p46 = scmp.eq.s32.totalorder %s15, 1
    %p47 = por %p45, %p46
    %p48 = scmp.ne.s32.totalorder %s37, %s38
    %p49 = scmp.eq.s32.totalorder %s15, 0
    %p50 = por %p48, %p49
    %p51 = scmp.ne.s32.totalorder %s37, %s38
    %p52 = scmp.eq.s32.totalorder %s16, 1
    %p53 = por %p51, %p52
    %p55 = scmp.ne.s32.totalorder %s38, %s54
    %p56 = scmp.eq.s32.totalorder %s16, 0
    %p57 = por %p55, %p56
    %s59 = sadd.s32 %s58, 1
    %p62 = scmp.eq.s32.totalorder %s10, 1
    %p63 = scmp.ne.s32.totalorder %s58, %s60
    %p64 = scmp.eq.s32.totalorder %s10, 0
    %p65 = por %p63, %p64
    %p66 = scmp.ne.s32.totalorder %s58, %s60
    %p67 = scmp.eq.s32.totalorder %s15, 1
    %p68 = por %p66, %p67
    %p69 = scmp.ne.s32.totalorder %s60, %s61
    %p70 = scmp.eq.s32.totalorder %s15, 0
    %p71 = por %p69, %p70
    %p72 = scmp.ne.s32.totalorder %s60, %s61
    %p73 = scmp.eq.s32.totalorder %s16, 1
    %p74 = por %p72, %p73
    %p76 = scmp.ne.s32.totalorder %s61, %s75
    %p77 = scmp.eq.s32.totalorder %s16, 0
    %p78 = por %p76, %p77
    %s79 = ssub.s32 %s17, %s29
    %p80 = scmp.eq.s32.totalorder %s79, 0
    %s82 = sadd.s32 %s81, 1
    %s83 = scalar_select %p80, %s81, %s82
    %p86 = pneg %p80
    %p87 = scmp.eq.s32.totalorder %s10, 1
    %p88 = por %p86, %p87
    %p89 = scmp.ne.s32.totalorder %s81, %s84
    %p90 = scmp.eq.s32.totalorder %s10, 0
    %p91 = por %p89, %p90
    %p92 = scmp.ne.s32.totalorder %s81, %s84
    %p93 = scmp.eq.s32.totalorder %s15, 1
    %p94 = por %p92, %p93
    %p95 = scmp.ne.s32.totalorder %s84, %s85
    %p96 = scmp.eq.s32.totalorder %s15, 0
    %p97 = por %p95, %p96
    %p98 = scmp.ne.s32.totalorder %s84, %s85
    %p99 = scmp.eq.s32.totalorder %s16, 1
    %p100 = por %p98, %p99
    %p102 = scmp.ne.s32.totalorder %s85, %s101
    %p103 = scmp.eq.s32.totalorder %s16, 0
    %p104 = por %p102, %p103
    %s105 = ssub.s32 %s17, %s29
    %p106 = scmp.eq.s32.totalorder %s105, 0
    %s108 = sadd.s32 %s107, 1
    %s109 = scalar_select %p106, %s107, %s108
    %p112 = pneg %p106
    %p113 = scmp.eq.s32.totalorder %s10, 1
    %p114 = por %p112, %p113
    %p115 = scmp.ne.s32.totalorder %s107, %s110
    %p116 = scmp.eq.s32.totalorder %s10, 0
    %p117 = por %p115, %p116
    %p118 = scmp.ne.s32.totalorder %s107, %s110
    %p119 = scmp.eq.s32.totalorder %s15, 1
    %p120 = por %p118, %p119
    %p121 = scmp.ne.s32.totalorder %s110, %s111
    %p122 = scmp.eq.s32.totalorder %s15, 0
    %p123 = por %p121, %p122
    %p124 = scmp.ne.s32.totalorder %s110, %s111
    %p125 = scmp.eq.s32.totalorder %s16, 1
    %p126 = por %p124, %p125
    %p128 = scmp.ne.s32.totalorder %s111, %s127
    %p129 = scmp.eq.s32.totalorder %s16, 0
    %p130 = por %p128, %p129
    %p131 = scmp.le.s32.totalorder 1, %s10
    %p132 = scmp.lt.s32.totalorder %s10, 3
    %p133 = pnand %p131, %p132
    %p134 = pneg %p133
    // Predicated region
    $region9: #{tpu_custom_call.1} parent=5 // pred_check
      _
    $region10: #{tpu_custom_call.1} parent=5 // pred_check_branch
      %136 = sbr.rel (%p133) target = $region12
    $region11: #{tpu_custom_call.1} parent=5 // pred_region
      %s137 = ssub.s32 %s10, 1
      // Predicated region
      $region13: #{tpu_custom_call.1} parent=11 // pred_check
        %p138 = pneg %p71
      $region14: #{tpu_custom_call.1} parent=11 // pred_check_branch
        %140 = sbr.rel (%p138) target = $region16
      $region15: #{tpu_custom_call.1} parent=11 // pred_region
        _
      $region16: #{tpu_custom_call.1} parent=11 // pred_fallthru
        _
    $region12: #{tpu_custom_call.1} parent=5 // pred_fallthru
      _
    %p141 = scmp.lt.s32.totalorder %s10, 2
    // Predicated region
    $region17: #{tpu_custom_call.1} parent=5 // pred_check
      %p142 = pneg %p141
    $region18: #{tpu_custom_call.1} parent=5 // pred_check_branch
      %144 = sbr.rel (%p142) target = $region20
    $region19: #{tpu_custom_call.1} parent=5 // pred_region
      // Predicated region
      $region21: #{tpu_custom_call.1} parent=19 // pred_check
        %p145 = pneg %p44
      $region22: #{tpu_custom_call.1} parent=19 // pred_check_branch
        %147 = sbr.rel (%p145) target = $region24
      $region23: #{tpu_custom_call.1} parent=19 // pred_region
        %p148 = scmp.lt.s32.totalorder %s17, 1
        %s149 = scalar_select %p148, %s17, 1
        %p150 = scmp.lt.s32.totalorder %s18, 0
        %s151 = scalar_select %p150, %s18, 0
        %s152 = smul.addr %s149, 8
        %s153 = sadd.s32 %s151, %s152
        %s154 = smul.addr %s153, 4
        %s155 = scalar_lea.vmem %s0, %s154
      $region24: #{tpu_custom_call.1} parent=19 // pred_fallthru
        _
    $region20: #{tpu_custom_call.1} parent=5 // pred_fallthru
      _
    %p156 = scmp.le.s32.totalorder 1, %s10
    %p157 = scmp.lt.s32.totalorder %s10, 3
    %p158 = pnand %p156, %p157
    %p159 = pneg %p158
    // Predicated region
    $region25: #{tpu_custom_call.1} parent=5 // pred_check
      _
    $region26: #{tpu_custom_call.1} parent=5 // pred_check_branch
      %161 = sbr.rel (%p158) target = $region28
    $region27: #{tpu_custom_call.1} parent=5 // pred_region
      %s162 = ssub.s32 %s10, 1
      %p163 = scmp.lt.s32.totalorder %s19, 1
      %s164 = scalar_select %p163, %s19, 1
      %p165 = scmp.lt.s32.totalorder %s20, 0
      %s166 = scalar_select %p165, %s20, 0
      %s167 = smul.addr %s164, 8
      %s168 = sadd.s32 %s166, %s167
      %s169 = smul.addr %s168, 4
      %s170 = scalar_lea.vmem %s0, %s169
      %p171 = pneg %p50
      %p172 = pneg %p47
      %p173 = pneg %p71
      %p174 = pneg %p68
      %p175 = pneg %p97
      %p176 = pneg %p94
      %p177 = scmp.lt.s32.totalorder %s19, 1
      %s178 = scalar_select %p177, %s19, 1
      %s179 = smul.addr %s178, 4
      %s180 = smul.addr %s179, 8
      %s181 = scalar_lea.vmem %s2, %s180
      %p182 = pneg %p123
      %p183 = pneg %p120
      %p184 = scmp.lt.s32.totalorder %s19, 1
      %s185 = scalar_select %p184, %s19, 1
      %s186 = smul.addr %s185, 4
      %s187 = smul.addr %s186, 8
      %s188 = scalar_lea.vmem %s3, %s187
      %p189 = scmp.lt.s32.totalorder %s19, 1
      %s190 = scalar_select %p189, %s19, 1
      %p191 = scmp.lt.s32.totalorder %s20, 0
      %s192 = scalar_select %p191, %s20, 0
      %s193 = smul.addr %s190, 8
      %s194 = sadd.s32 %s192, %s193
      %s195 = smul.addr %s194, 4
      %s196 = scalar_lea.vmem %s0, %s195
      %p197 = scmp.lt.s32.totalorder %s19, 1
      %s198 = scalar_select %p197, %s19, 1
      %s199 = smul.addr %s198, 4
      %s200 = smul.addr %s199, 8
      %s201 = scalar_lea.vmem %s2, %s200
      %p202 = scmp.lt.s32.totalorder %s19, 1
      %s203 = scalar_select %p202, %s19, 1
      %s204 = smul.addr %s203, 4
      %s205 = smul.addr %s204, 8
      %s206 = scalar_lea.vmem %s3, %s205
      %p208 = scmp.eq.s32.totalorder %s20, 0
      // Predicated region
      $region29: #{tpu_custom_call.1} parent=27 // pred_check
        %p209 = pneg %p208
      $region30: #{tpu_custom_call.1} parent=27 // pred_check_branch
        %211 = sbr.rel (%p209) target = $region32
      $region31: #{tpu_custom_call.1} parent=27 // pred_region
        %vm212 = vcmask 7168
        %213 = vst.msk [vmem:[%s201] sm:$0xff] %vm212, 0.0
        %214 = vst.msk [vmem:[%s201 + $0x8] sm:$0xff] %vm212, 0.0
        %215 = vst.msk [vmem:[%s201 + $0x10] sm:$0xff] %vm212, 0.0
        %216 = vst.msk [vmem:[%s201 + $0x18] sm:$0xff] %vm212, 0.0
        %217 = vst.msk [vmem:[%s206] sm:$0xff] %vm212, 0.0
        %218 = vst.msk [vmem:[%s206 + $0x8] sm:$0xff] %vm212, 0.0
        %219 = vst.msk [vmem:[%s206 + $0x10] sm:$0xff] %vm212, 0.0
        %220 = vst.msk [vmem:[%s206 + $0x18] sm:$0xff] %vm212, 0.0
      $region32: #{tpu_custom_call.1} parent=27 // pred_fallthru
        _
      %v221 = vld [vmem:[%s1] sm:$0xf]
      %v222 = vld [vmem:[%s1 + $0x4] sm:$0xf]
      %v223 = vld [vmem:[%s1 + $0x8] sm:$0xf]
      %v224 = vld [vmem:[%s1 + $0xc] sm:$0xf]
      %v225 = vld [vmem:[%s196] sm:$0xf]
      %v226 = vld [vmem:[%s196 + $0x4] sm:$0xf]
      %v227 = vld [vmem:[%s196 + $0x8] sm:$0xf]
      %v228 = vld [vmem:[%s196 + $0xc] sm:$0xf]
      %v229 = vld [vmem:[%s196 + $0x10] sm:$0xf]
      %v230 = vld [vmem:[%s196 + $0x14] sm:$0xf]
      %v231 = vld [vmem:[%s196 + $0x18] sm:$0xf]
      %v232 = vld [vmem:[%s196 + $0x1c] sm:$0xf]
      %v237 = vunpack.c.l.b16 %v221
      %v238 = vunpack.c.l.b16 %v222
      %v239 = vunpack.c.l.b16 %v223
      %v240 = vunpack.c.l.b16 %v224
      %v241 = vpack.c.b16 %v238, %v237
      %v242 = vpack.c.b16 %v240, %v239
      %v251 = vunpack.c.l.b16 %v225
      %v252 = vunpack.c.l.b16 %v226
      %v253 = vunpack.c.l.b16 %v227
      %v254 = vunpack.c.l.b16 %v228
      %v255 = vunpack.c.l.b16 %v229
      %v256 = vunpack.c.l.b16 %v230
      %v257 = vunpack.c.l.b16 %v231
      %v258 = vunpack.c.l.b16 %v232
      %v259 = vpack.c.b16 %v252, %v251
      %v260 = vpack.c.b16 %v254, %v253
      %v261 = vpack.c.b16 %v256, %v255
      %v262 = vpack.c.b16 %v258, %v257
      %vm267 = vcmask 523264
      %v269 = vsel %vm267, %v241, 0
      %v272 = vsel %vm267, %v242, 0
      %274 = vmatpush.bf16.msra.mxu0 0
      %275 = vmatpush.bf16.msra.mxu0 0
      %276 = vmatpush.bf16.msra.mxu0 0
      %277 = vmatpush.bf16.msra.mxu0 0
      %278 = vmatpush.bf16.msra.mxu0 %v262
      %279 = vmatpush.bf16.msra.mxu0 %v261
      %280 = vmatpush.bf16.msra.mxu0 %v260
      %281 = vmatpush.bf16.msra.mxu0 %v259
      %282 = vmatmul.bf16.gmra.mxu0 %v269
      %v283 = vpop.f32.mrf.mxu0
      %v284 = vadd.f32 0.0, %v283
      %v285 = vpop.f32.mrf.mxu0
      %v286 = vadd.f32 0.0, %v285
      %287 = vmatmul.bf16.gmra.mxu0 %v272
      %v288 = vpop.f32.mrf.mxu0
      %v289 = vadd.f32 0.0, %v288
      %v290 = vpop.f32.mrf.mxu0
      %v291 = vadd.f32 0.0, %v290
      %292 = vdwg.mxu0
      %v293 = vld [vmem:[%s201] sm:$0xff]
      %v294 = vld [vmem:[%s201 + $0x8] sm:$0xff]
      %v295 = vld [vmem:[%s201 + $0x10] sm:$0xff]
      %v296 = vld [vmem:[%s201 + $0x18] sm:$0xff]
      %vm297 = vcmask 130048
      %v298 = vsel %vm297, %v284, 0.0
      %299 = vadd.xlane.f32.xlu0 %v298
      %v300 = vpop.xlane.xlu0 %299
      %v301 = vsel %vm297, %v286, 0.0
      %302 = vadd.xlane.f32.xlu0 %v301
      %v303 = vpop.xlane.xlu0 %302
      %v304 = vsel %vm297, %v289, 0.0
      %305 = vadd.xlane.f32.xlu0 %v304
      %v306 = vpop.xlane.xlu0 %305
      %v307 = vsel %vm297, %v291, 0.0
      %308 = vadd.xlane.f32.xlu0 %v307
      %v309 = vpop.xlane.xlu0 %308
      %v310 = vadd.f32 %v293, %v300
      %v311 = vadd.f32 %v294, %v303
      %v312 = vadd.f32 %v295, %v306
      %v313 = vadd.f32 %v296, %v309
      %vm314 = vcmask 7168
      %315 = vst.msk [vmem:[%s201] sm:$0xff] %vm314, %v310
      %316 = vst.msk [vmem:[%s201 + $0x8] sm:$0xff] %vm314, %v311
      %317 = vst.msk [vmem:[%s201 + $0x10] sm:$0xff] %vm314, %v312
      %318 = vst.msk [vmem:[%s201 + $0x18] sm:$0xff] %vm314, %v313
      %v319 = vld [vmem:[%s206] sm:$0xff]
      %v320 = vld [vmem:[%s206 + $0x8] sm:$0xff]
      %v321 = vld [vmem:[%s206 + $0x10] sm:$0xff]
      %v322 = vld [vmem:[%s206 + $0x18] sm:$0xff]
      %v323 = vmul.f32 %v284, %v284
      %v324 = vmul.f32 %v286, %v286
      %v325 = vmul.f32 %v289, %v289
      %v326 = vmul.f32 %v291, %v291
      %v327 = vsel %vm297, %v323, 0.0
      %328 = vadd.xlane.f32.xlu0 %v327
      %v329 = vpop.xlane.xlu0 %328
      %v330 = vsel %vm297, %v324, 0.0
      %331 = vadd.xlane.f32.xlu0 %v330
      %v332 = vpop.xlane.xlu0 %331
      %v333 = vsel %vm297, %v325, 0.0
      %334 = vadd.xlane.f32.xlu0 %v333
      %v335 = vpop.xlane.xlu0 %334
      %v336 = vsel %vm297, %v326, 0.0
      %337 = vadd.xlane.f32.xlu0 %v336
      %v338 = vpop.xlane.xlu0 %337
      %v339 = vadd.f32 %v319, %v329
      %v340 = vadd.f32 %v320, %v332
      %v341 = vadd.f32 %v321, %v335
      %v342 = vadd.f32 %v322, %v338
      %343 = vst.msk [vmem:[%s206] sm:$0xff] %vm314, %v339
      %344 = vst.msk [vmem:[%s206 + $0x8] sm:$0xff] %vm314, %v340
      %345 = vst.msk [vmem:[%s206 + $0x10] sm:$0xff] %vm314, %v341
      %346 = vst.msk [vmem:[%s206 + $0x18] sm:$0xff] %vm314, %v342
      %p347 = scmp.lt.s32.totalorder %s19, 1
      %s348 = scalar_select %p347, %s19, 1
      %s349 = smul.addr %s348, 4
      %s350 = smul.addr %s349, 8
      %s351 = scalar_lea.vmem %s2, %s350
      %p352 = scmp.lt.s32.totalorder %s19, 1
      %s353 = scalar_select %p352, %s19, 1
      %s354 = smul.addr %s353, 4
      %s355 = smul.addr %s354, 8
      %s356 = scalar_lea.vmem %s3, %s355
      // Predicated region
      $region33: #{tpu_custom_call.1} parent=27 // pred_check
        %p357 = pneg %p94
      $region34: #{tpu_custom_call.1} parent=27 // pred_check_branch
        %359 = sbr.rel (%p357) target = $region36
      $region35: #{tpu_custom_call.1} parent=27 // pred_region
        _
      $region36: #{tpu_custom_call.1} parent=27 // pred_fallthru
        _
      // Predicated region
      $region37: #{tpu_custom_call.1} parent=27 // pred_check
        %p360 = pneg %p120
      $region38: #{tpu_custom_call.1} parent=27 // pred_check_branch
        %362 = sbr.rel (%p360) target = $region40
      $region39: #{tpu_custom_call.1} parent=27 // pred_region
        _
      $region40: #{tpu_custom_call.1} parent=27 // pred_fallthru
        _
    $region28: #{tpu_custom_call.1} parent=5 // pred_fallthru
      _
    %p363 = scmp.le.s32.totalorder 2, %s10
    // Predicated region
    $region41: #{tpu_custom_call.1} parent=5 // pred_check
      %p364 = pneg %p363
    $region42: #{tpu_custom_call.1} parent=5 // pred_check_branch
      %366 = sbr.rel (%p364) target = $region44
    $region43: #{tpu_custom_call.1} parent=5 // pred_region
      %s367 = ssub.s32 %s10, 2
      // Predicated region
      $region45: #{tpu_custom_call.1} parent=43 // pred_check
        %p368 = pneg %p100
      $region46: #{tpu_custom_call.1} parent=43 // pred_check_branch
        %370 = sbr.rel (%p368) target = $region48
      $region47: #{tpu_custom_call.1} parent=43 // pred_region
        %p371 = scmp.lt.s32.totalorder %s21, 1
        %s372 = scalar_select %p371, %s21, 1
        %s373 = smul.addr %s372, 4
        %s374 = smul.addr %s373, 8
        %s375 = scalar_lea.vmem %s2, %s374
      $region48: #{tpu_custom_call.1} parent=43 // pred_fallthru
        _
      // Predicated region
      $region49: #{tpu_custom_call.1} parent=43 // pred_check
        %p376 = pneg %p126
      $region50: #{tpu_custom_call.1} parent=43 // pred_check_branch
        %378 = sbr.rel (%p376) target = $region52
      $region51: #{tpu_custom_call.1} parent=43 // pred_region
        %p379 = scmp.lt.s32.totalorder %s21, 1
        %s380 = scalar_select %p379, %s21, 1
        %s381 = smul.addr %s380, 4
        %s382 = smul.addr %s381, 8
        %s383 = scalar_lea.vmem %s3, %s382
      $region52: #{tpu_custom_call.1} parent=43 // pred_fallthru
        _
    $region44: #{tpu_custom_call.1} parent=5 // pred_fallthru
      _
  $region6: #{tpu_custom_call.1} parent=0 // loop_footer
    %s14 = sadd.s32 1, %s10
  $region7: #{tpu_custom_call.1} parent=0 // loop_footer_branch
    %9 = sbr.rel target = $region3
  $region8: #{tpu_custom_call.1} parent=0 // loop_exit
    _

</llo_original>
